<compile_context>
chip_gen: v5e
topology: v5e:2x2
jax: 0.10.0
libtpu: 0.0.40
codegen_flags: <defaults>
</compile_context>

<pallas_src>
import functools

import jax
import jax.numpy as jnp
from jax import lax
from jax.experimental import pallas as pl
from jax.experimental.pallas import tpu as pltpu


def _round_up(v, m):
    return (v + m - 1) // m * m


def _vmem_limit_bytes():
    # Per-generation VMEM budget with headroom for pipeline buffers / compiler scratch.
    # v5e/v6e: 128 MiB physical -> 96 MiB cap; v7x: 64 MiB physical -> 48 MiB.
    try:
        cap = pltpu.get_tpu_info().vmem_capacity_bytes
    except Exception:
        cap = 64 << 20
    return min(int(cap * 0.75), 96 << 20)


def _spec(shape, index_map, *, single_buffer=False):
    """Resident operands (constant index_map, never re-fetched) can be single-buffered
    so the pipeline does not hold a dead second VMEM copy (decisive on v7x)."""
    if single_buffer:
        return pl.BlockSpec(shape, index_map, pipeline_mode=pl.Buffered(1))
    return pl.BlockSpec(shape, index_map)


# ----------------------------- regime A kernels (in_dim < Dp) -----------------------------

def _stats_fused_kernel(x_ref, w12_ref, part_ref):
    """Pass 1: accumulate per-feature [sum; sumsq] of the bias-free product y = x @ W12.
    Zero-padded batch rows contribute exactly 0, so no row masking is needed.  The
    (2, Dp) output block is constant along the inner 'arbitrary' axis -> it acts as a
    per-core VMEM-resident accumulator."""
    j = pl.program_id(1)

    @pl.when(j == 0)
    def _init():
        part_ref[...] = jnp.zeros_like(part_ref)

    y = jnp.dot(x_ref[...], w12_ref[...], preferred_element_type=jnp.float32)
    part_ref[...] += jnp.concatenate(
        [jnp.sum(y, axis=0, keepdims=True), jnp.sum(y * y, axis=0, keepdims=True)], axis=0)


def _main_fused_kernel(x_ref, w_ref, p_ref, o_ref, *, d_pad):
    """Pass 2: [h | y] = x @ [W1 | W12] + [b1 | 0]; BN affine (precomputed scale/shift
    already absorbing mean/gamma/beta); GLU gate; L2 normalize."""
    p = p_ref[...]                                   # (2, 2*Dp): [b1|0], [scale|shift]
    acc = jnp.dot(x_ref[...], w_ref[...], preferred_element_type=jnp.float32)
    acc = acc + p[0:1, :]
    h = acc[:, :d_pad]
    x1n = acc[:, d_pad:] * p[1:2, :d_pad] + p[1:2, d_pad:]
    gated = h * jax.nn.sigmoid(x1n)
    ssq = jnp.sum(gated * gated, axis=1, keepdims=True)
    o_ref[...] = (gated * lax.rsqrt(jnp.maximum(ssq, 1e-24))).astype(o_ref.dtype)


# ---------------------------- regime B kernels (in_dim >= Dp) ----------------------------

def _fc_stats_cache_kernel(x_ref, w1_ref, w2_ref, b1_ref, hx_ref, part_ref, *, d_pad):
    """Pass 1: two serial matmuls (fewer FLOPs than fused W1@W2 when in_dim >= Dp),
    cache [h | y] to HBM so pass 2 never re-reads x nor touches the MXU, and accumulate
    bias-free stats of y."""
    j = pl.program_id(1)

    @pl.when(j == 0)
    def _init():
        part_ref[...] = jnp.zeros_like(part_ref)

    h_nb = jnp.dot(x_ref[...], w1_ref[...], preferred_element_type=jnp.float32)
    y = jnp.dot(h_nb.astype(w2_ref.dtype), w2_ref[...], preferred_element_type=jnp.float32)
    part_ref[...] += jnp.concatenate(
        [jnp.sum(y, axis=0, keepdims=True), jnp.sum(y * y, axis=0, keepdims=True)], axis=0)
    hx_ref[:, :d_pad] = (h_nb + b1_ref[...]).astype(hx_ref.dtype)
    hx_ref[:, d_pad:] = y.astype(hx_ref.dtype)


def _gate_norm_kernel(hx_ref, p_ref, o_ref, *, d_pad):
    """Pass 2: pure VPU/EUP tail on the cached [h | y]: BN affine, GLU, L2 normalize."""
    hx = hx_ref[...].astype(jnp.float32)
    h = hx[:, :d_pad]
    x1n = hx[:, d_pad:] * p_ref[0:1, :] + p_ref[1:2, :]   # scale / shift rows
    gated = h * jax.nn.sigmoid(x1n)
    ssq = jnp.sum(gated * gated, axis=1, keepdims=True)
    o_ref[...] = (gated * lax.rsqrt(jnp.maximum(ssq, 1e-24))).astype(o_ref.dtype)


# --------------------------------------- wrapper ---------------------------------------

def make_gated_embedding_unit(w1, b1, w2, b2, gamma, beta, *, bn_eps=1e-5,
                              compute_dtype=None, out_dtype=None):
    """Prepare (fuse / pad / cast) the weights ONCE and return a forward(x) closure.

    w1: (in_dim, out_dim); w2: (out_dim, out_dim); b1/b2/gamma/beta: (1, out_dim)
    (weights transposed vs. torch nn.Linear.weight).  forward(x): (B, in_dim) ->
    (B, out_dim) in out_dtype (default x.dtype; pass jnp.bfloat16 to halve output
    stores on v5e when downstream tolerates it)."""
    in_dim, D = w1.shape
    Dp = _round_up(D, 128)                     # lane-dense feature dim
    pad_d = Dp - D
    f32 = jnp.float32
    vmem_limit = _vmem_limit_bytes()

    cache_hx = in_dim >= Dp                    # regime B

    # bf16 compute (native MXU rate + half the resident weight / x DMA bytes) only
    # auto-engages when the f32 resident weights would pressure VMEM (v7x: 64 MiB).
    resident_f32 = ((in_dim * Dp + Dp * Dp) if cache_hx else in_dim * 2 * Dp) * 4
    if compute_dtype is None and resident_f32 > vmem_limit // 4:
        compute_dtype = jnp.bfloat16
    mm_dtype = compute_dtype                   # None -> keep caller dtypes
    wd = mm_dtype if mm_dtype is not None else w1.dtype

    w1p = jnp.pad(w1, ((0, 0), (0, pad_d)))                    # zero pad -> h pad cols == 0
    b1p = jnp.pad(b1.astype(f32), ((0, 0), (0, pad_d)))
    gamma_p = jnp.pad(gamma.astype(f32), ((0, 0), (0, pad_d)))  # zero pad -> gated pad == 0
    beta_p = jnp.pad(beta.astype(f32), ((0, 0), (0, pad_d)))
    # b2 / b12 = b1@W2 + b2 are cancelled exactly by BatchNorm's mean subtraction.
    del b2

    if cache_hx:
        w1c = w1p.astype(wd)
        w2c = jnp.pad(w2, ((0, pad_d), (0, pad_d))).astype(wd)
        weights_bytes = w1c.size * w1c.dtype.itemsize + w2c.size * w2c.dtype.itemsize
    else:
        w12p = jnp.pad(jnp.dot(w1.astype(f32), w2.astype(f32),
                               preferred_element_type=f32), ((0, 0), (0, pad_d)))
        wcat = jnp.concatenate([w1p.astype(wd), w12p.astype(wd)], axis=1)   # (in, 2*Dp)
        b1row = jnp.concatenate([b1p, jnp.zeros((1, Dp), f32)], axis=1)     # (1, 2*Dp)
        weights_bytes = wcat.size * wcat.dtype.itemsize
    single_buffer = weights_bytes > (2 << 20)

    def forward(x):
        B, k = x.shape
        assert k == in_dim
        xc = x if mm_dtype is None else x.astype(mm_dtype)
        odt = out_dtype if out_dtype is not None else x.dtype

        # ---- batch tile selection (bigger tiles amortize ~0.35us/step; clamp to VMEM) ----
        if B <= 128:
            mult = 16 if xc.dtype.itemsize == 2 else 8
            tile_b = _round_up(max(B, mult), mult)
        else:
            tile_b = 512 if B >= 2048 else (256 if B >= 512 else 128)
            nbuf_w = 1 if single_buffer else 2
            budget = max(vmem_limit - nbuf_w * weights_bytes, 4 << 20)
            per_row = 2 * in_dim * xc.dtype.itemsize + 24 * Dp   # rough: x dbl-buf + outs + f32 tmps
            while tile_b > 128 and tile_b * per_row > budget:
                tile_b //= 2

        nb = -(-B // tile_b)
        ncore = 2 if nb >= 2 else 1            # pass-1 core split (v7x: 2 TCs)
        nbpc = -(-nb // ncore)
        nb_stats = ncore * nbpc
        Bp = nb_stats * tile_b                 # rows seen by pass 1 (extra rows are zero)
        nb_out = nb                            # pass 2 only needs the real tiles
        Bo = nb_out * tile_b

        xp = xc if Bp == B else jnp.pad(xc, ((0, Bp - B), (0, 0)))
        part_shape = jax.ShapeDtypeStruct((2, ncore * Dp), f32)
        sem1 = pltpu.CompilerParams(dimension_semantics=("parallel", "arbitrary"),
                                    vmem_limit_bytes=vmem_limit)
        sem2 = pltpu.CompilerParams(dimension_semantics=("parallel",),
                                    vmem_limit_bytes=vmem_limit)

        # ------------------------------ pass 1: stats (+cache) ------------------------------
        if cache_hx:
            cache_dt = jnp.bfloat16 if xc.dtype == jnp.bfloat16 else f32
            hx, part = pl.pallas_call(
                functools.partial(_fc_stats_cache_kernel, d_pad=Dp),
                out_shape=(jax.ShapeDtypeStruct((Bp, 2 * Dp), cache_dt), part_shape),
                grid_spec=pltpu.PrefetchScalarGridSpec(
                    num_scalar_prefetch=0,
                    grid=(ncore, nbpc),
                    in_specs=[
                        pl.BlockSpec((tile_b, in_dim), lambda c, j: (c * nbpc + j, 0)),
                        _spec((in_dim, Dp), lambda c, j: (0, 0), single_buffer=single_buffer),
                        _spec((Dp, Dp), lambda c, j: (0, 0), single_buffer=single_buffer),
                        pl.BlockSpec((1, Dp), lambda c, j: (0, 0)),
                    ],
                    out_specs=(
                        pl.BlockSpec((tile_b, 2 * Dp), lambda c, j: (c * nbpc + j, 0)),
                        pl.BlockSpec((2, Dp), lambda c, j: (0, c)),   # per-core partials
                    ),
                ),
                compiler_params=sem1,
            )(xp, w1c, w2c, b1p)
        else:
            part = pl.pallas_call(
                _stats_fused_kernel,
                out_shape=part_shape,
                grid_spec=pltpu.PrefetchScalarGridSpec(
                    num_scalar_prefetch=0,
                    grid=(ncore, nbpc),
                    in_specs=[
                        pl.BlockSpec((tile_b, in_dim), lambda c, j: (c * nbpc + j, 0)),
                        # read the W12 half of wcat (block col index 1) -- no 2nd HBM copy
                        _spec((in_dim, Dp), lambda c, j: (0, 1), single_buffer=single_buffer),
                    ],
                    out_specs=pl.BlockSpec((2, Dp), lambda c, j: (0, c)),
                ),
                compiler_params=sem1,
            )(xp, wcat)

        # ---- tiny finalize in the wrapper: fold per-core partials -> BN scale / shift ----
        tot = part.reshape(2, ncore, Dp).sum(axis=1)
        mean = tot[0:1, :] * (1.0 / B)                     # mean of bias-free product
        var = jnp.maximum(tot[1:2, :] * (1.0 / B) - mean * mean, 0.0)
        scale = gamma_p * lax.rsqrt(var + bn_eps)
        shift = beta_p - mean * scale                      # bias cancels inside BN

        # --------------------- pass 2: gate + normalize (parallel tiles) ---------------------
        out_shape = jax.ShapeDtypeStruct((Bo, Dp), odt)
        if cache_hx:
            params = jnp.concatenate([scale, shift], axis=0)              # (2, Dp)
            out_p = pl.pallas_call(
                functools.partial(_gate_norm_kernel, d_pad=Dp),
                out_shape=out_shape,
                grid_spec=pltpu.PrefetchScalarGridSpec(
                    num_scalar_prefetch=0,
                    grid=(nb_out,),
                    in_specs=[
                        pl.BlockSpec((tile_b, 2 * Dp), lambda i: (i, 0)),
                        pl.BlockSpec((2, Dp), lambda i: (0, 0)),
                    ],
                    out_specs=pl.BlockSpec((tile_b, Dp), lambda i: (i, 0)),
                ),
                compiler_params=sem2,
            )(hx, params)
        else:
            params = jnp.concatenate(
                [b1row, jnp.concatenate([scale, shift], axis=1)], axis=0)  # (2, 2*Dp)
            out_p = pl.pallas_call(
                functools.partial(_main_fused_kernel, d_pad=Dp),
                out_shape=out_shape,
                grid_spec=pltpu.PrefetchScalarGridSpec(
                    num_scalar_prefetch=0,
                    grid=(nb_out,),
                    in_specs=[
                        pl.BlockSpec((tile_b, in_dim), lambda i: (i, 0)),
                        _spec((in_dim, 2 * Dp), lambda i: (0, 0), single_buffer=single_buffer),
                        pl.BlockSpec((2, 2 * Dp), lambda i: (0, 0)),
                    ],
                    out_specs=pl.BlockSpec((tile_b, Dp), lambda i: (i, 0)),
                ),
                compiler_params=sem2,
            )(xp, wcat, params)

        return out_p[:B, :D]

    return forward


def gated_embedding_unit(x, w1, b1, w2, b2, gamma, beta, *, bn_eps=1e-5):
    """One-shot convenience wrapper.  For repeated calls, build the forward once with
    make_gated_embedding_unit (hoists W1@W2, padding, concatenation, casts)."""
    return make_gated_embedding_unit(w1, b1, w2, b2, gamma, beta, bn_eps=bn_eps)(x)


def _reference(x, w1, b1, w2, b2, gamma, beta, eps=1e-5):
    h = x @ w1 + b1
    x1 = h @ w2 + b2
    mean = x1.mean(0, keepdims=True)
    var = ((x1 - mean) ** 2).mean(0, keepdims=True)
    x1n = (x1 - mean) / jnp.sqrt(var + eps) * gamma + beta
    g = h * jax.nn.sigmoid(x1n)
    n = jnp.sqrt((g * g).sum(1, keepdims=True))
    return g / jnp.maximum(n, 1e-12)


if __name__ == "__main__":
    key = jax.random.PRNGKey(0)

    def make_params(k, in_dim, out_dim):
        k_w1, k_b1, k_w2, k_b2, k_g, k_be = jax.random.split(k, 6)
        lim1 = 1.0 / float(in_dim) ** 0.5
        w1 = jax.random.uniform(k_w1, (in_dim, out_dim), jnp.float32, -lim1, lim1)
        b1 = jax.random.uniform(k_b1, (1, out_dim), jnp.float32, -lim1, lim1)
        lim2 = 1.0 / float(out_dim) ** 0.5
        w2 = jax.random.uniform(k_w2, (out_dim, out_dim), jnp.float32, -lim2, lim2)
        b2 = jax.random.uniform(k_b2, (1, out_dim), jnp.float32, -lim2, lim2)
        gamma = jax.random.uniform(k_g, (1, out_dim), jnp.float32, 0.5, 1.5)
        beta = 0.1 * jax.random.normal(k_be, (1, out_dim), jnp.float32)
        return w1, b1, w2, b2, gamma, beta

    # Config 1 (in_dim < out_dim): fused-W12 regime; exercises batch tiling (200 -> 2x128
    #   with zero-padded rows), lane padding (160 -> 256) and the 2-way stats core split.
    # Config 2 (in_dim >= out_dim): unfused + cached-[h|y] regime; pass 2 is elementwise.
    for (B, in_dim, out_dim) in [(200, 96, 160), (200, 256, 128)]:
        key, k_p, k_x = jax.random.split(key, 3)
        params = make_params(k_p, in_dim, out_dim)
        x = jax.random.normal(k_x, (B, in_dim), dtype=jnp.float32)

        fwd = make_gated_embedding_unit(*params)        # weight prep hoisted
        out = jax.block_until_ready(fwd(x))
        ref = _reference(x, *params)

        assert out.shape == (B, out_dim)
        err = float(jnp.max(jnp.abs(out - ref)))
        assert jnp.allclose(out, ref, atol=1e-4, rtol=1e-4), err

    print("KERNEL_OK")
</pallas_src>

<mosaic_0001>
module attributes {stable_mosaic.version = 11 : i64} {
  func.func @_stats_fused_kernel(%arg0: i32, %arg1: i32, %arg2: memref<128x96xf32, #tpu.memory_space<vmem>>, %arg3: memref<96x256xf32, #tpu.memory_space<vmem>>, %arg4: memref<2x256xf32, #tpu.memory_space<vmem>>) attributes {dimension_semantics = [#tpu.dimension_semantics<parallel>, #tpu.dimension_semantics<arbitrary>], iteration_bounds = array<i64: 2, 1>, scalar_prefetch = 0 : i64, scratch_operands = 0 : i64, tpu.core_type = #tpu.core_type<tc>, window_params = [{transform_indices = @transform_0, window_bounds = array<i64: 128, 96>}, {transform_indices = @transform_1, window_bounds = array<i64: 96, 256>}, {transform_indices = @transform_2, window_bounds = array<i64: 2, 256>}]} {
    %c0_i32 = arith.constant 0 : i32
    %0 = arith.cmpi eq, %arg1, %c0_i32 : i32
    %1 = arith.extui %0 : i1 to i32
    %c0_i32_0 = arith.constant 0 : i32
    %2 = arith.cmpi ne, %1, %c0_i32_0 : i32
    scf.if %2 {
      %cst_10 = arith.constant 0.000000e+00 : f32
      %15 = vector.broadcast %cst_10 : f32 to vector<2x256xf32>
      %c0_11 = arith.constant 0 : index
      %c0_12 = arith.constant 0 : index
      %16 = vector.load %arg4[%c0_11, %c0_12] : memref<2x256xf32, #tpu.memory_space<vmem>>, vector<2x256xf32>
      tpu.vector_store %arg4[%c0_11, %c0_12], %15 {strides = array<i32>} : memref<2x256xf32, #tpu.memory_space<vmem>>, vector<2x256xf32>,
    } else {
    }
    %c0 = arith.constant 0 : index
    %c0_1 = arith.constant 0 : index
    %3 = vector.load %arg2[%c0, %c0_1] : memref<128x96xf32, #tpu.memory_space<vmem>>, vector<128x96xf32>
    %c0_2 = arith.constant 0 : index
    %c0_3 = arith.constant 0 : index
    %4 = vector.load %arg3[%c0_2, %c0_3] : memref<96x256xf32, #tpu.memory_space<vmem>>, vector<96x256xf32>
    %cst = arith.constant dense<0.000000e+00> : vector<128x256xf32>
    %5 = tpu.matmul %3, %4, %cst {dimension_numbers = #tpu.dot_dimension_numbers<[1], [0], [0], [1], [0, 0, 1, 1], [], []>} : vector<128x96xf32>, vector<96x256xf32>, vector<128x256xf32> -> vector<128x256xf32>
    %c0_4 = arith.constant 0 : index
    %c0_5 = arith.constant 0 : index
    %6 = vector.load %arg4[%c0_4, %c0_5] : memref<2x256xf32, #tpu.memory_space<vmem>>, vector<2x256xf32>
    %cst_6 = arith.constant dense<0.000000e+00> : vector<256xf32>
    %7 = vector.multi_reduction <add>, %5, %cst_6 [0] : vector<128x256xf32> to vector<256xf32>
    %8 = vector.shape_cast %7 : vector<256xf32> to vector<1x256xf32>
    %9 = arith.mulf %5, %5 : vector<128x256xf32>
    %cst_7 = arith.constant dense<0.000000e+00> : vector<256xf32>
    %10 = vector.multi_reduction <add>, %9, %cst_7 [0] : vector<128x256xf32> to vector<256xf32>
    %11 = vector.shape_cast %10 : vector<256xf32> to vector<1x256xf32>
    %12 = tpu.concatenate %8, %11 in 0 : vector<1x256xf32>, vector<1x256xf32> -> vector<2x256xf32>
    %13 = arith.addf %6, %12 : vector<2x256xf32>
    %c0_8 = arith.constant 0 : index
    %c0_9 = arith.constant 0 : index
    %14 = vector.load %arg4[%c0_8, %c0_9] : memref<2x256xf32, #tpu.memory_space<vmem>>, vector<2x256xf32>
    tpu.vector_store %arg4[%c0_8, %c0_9], %13 {strides = array<i32>} : memref<2x256xf32, #tpu.memory_space<vmem>>, vector<2x256xf32>,
    return
  }
  func.func @transform_0(%arg0: i32, %arg1: i32) -> (i32, i32) {
    %c1_i32 = arith.constant 1 : i32
    %0 = arith.muli %arg0, %c1_i32 : i32
    %1 = arith.addi %0, %arg1 : i32
    %c0_i32 = arith.constant 0 : i32
    %c0_i32_0 = arith.constant 0 : i32
    return %1, %c0_i32 : i32, i32
  }
  func.func @transform_1(%arg0: i32, %arg1: i32) -> (i32, i32) {
    %c0_i32 = arith.constant 0 : i32
    %c1_i32 = arith.constant 1 : i32
    %c0_i32_0 = arith.constant 0 : i32
    return %c0_i32, %c1_i32 : i32, i32
  }
  func.func @transform_2(%arg0: i32, %arg1: i32) -> (i32, i32) {
    %c0_i32 = arith.constant 0 : i32
    %c0_i32_0 = arith.constant 0 : i32
    return %c0_i32, %arg0 : i32, i32
  }
}

</mosaic_0001>

<llo_original>
// kernel: tpu_custom_call.1
$region0: #{tpu_custom_call.1}
  #allocation0 [shape = 'u32[]', space=smem, size = 0x4, offset = 0x4, fixed_abs, tag = 'smem constant byte address 0x4 - core index']
  #allocation1 [shape = 'u32[72,128]{1,0:T(1,128)}', space=vmem, size = 0x9000, scoped, tag = 'internal scratch']
  %s0 = inlined_call_operand.vmem [shape: f32[256,96], index: 0, kind: input, shape index: {}]
  %s1 = inlined_call_operand.vmem [shape: f32[96,512], index: 1, kind: input, shape index: {}]
  %s2 = inlined_call_operand.hbm [shape: f32[2,512], index: 2, kind: output, shape index: {}]
  %s3 = sld [smem:[#allocation0]]
  $region68: #{tpu_custom_call.1} parent=0
    _
  %s5 = ssub.s32 1, %s3
  %s6 = scalar_select 0, %s5, %s3
  $region1: #{tpu_custom_call.1} parent=0
    #allocation2 [shape = 'u8[98304]{0}', space=vmem, size = 0x18000, scoped, tag = 'input window, operand 1, single buffered']
    #allocation3 [shape = 'u8[4096]{0}', space=vmem, size = 0x1000, scoped, tag = 'output window, operand 0']
    #allocation4 [shape = 's32[2]{0}', space=sflag, size = 0x8, scoped, tag = 'scoped memory for tpu_custom_call.1']
    %7 = vsyncpa [#allocation4], 0
    %s8 = scalar_lea.sflag [#allocation4], 1
    %9 = vsyncpa %s8, 0
    loop: start=0, step=1, limit=4
    $region2: #{tpu_custom_call.1} parent=1 // loop_pre_header
      _
    $region3: #{tpu_custom_call.1} parent=1 // loop_header
      %s11 = sphi 0, %s15
      %p12 = scmp.ge.s32.totalorder %s11, 4
      %s18 = sphi 0, %s30
      %s19 = sphi 0, %s26
      %s20 = sphi 0, %s18
      %s21 = sphi 0, %s19
      %s22 = sphi 0, %s20
      %s23 = sphi 0, %s21
      %s35 = sphi 0, %s37
      %s38 = sphi 0, %s35
      %s39 = sphi 0, %s38
      %s55 = sphi 0, %s39
      %s59 = sphi 0, %s59
      %s61 = sphi 0, %s59
      %s62 = sphi 0, %s61
      %s76 = sphi 0, %s62
      %s82 = sphi 0, %s84
      %s85 = sphi 0, %s82
      %s86 = sphi 0, %s85
      %s102 = sphi 0, %s86
    $region4: #{tpu_custom_call.1} parent=1 // loop_header_branch
      %14 = sbr.rel (%p12) target = $region8
    $region5: #{tpu_custom_call.1} parent=1 // loop_body
      %s16 = ssub.s32 %s11, 1
      %s17 = ssub.s32 %s11, 2
      %s24 = sadd.s32 1, %s19
      %p25 = scmp.ge.s32.totalorder %s24, 1
      %s26 = scalar_select %p25, 0, %s24
      %s27 = sadd.s32 1, %s18
      %s28 = scalar_select %p25, %s27, %s18
      %p29 = scmp.ge.s32.totalorder %s28, 2
      %s30 = scalar_select %p29, 0, %s28
      %s31 = sadd.s32 %s18, %s19
      %s32 = sadd.s32 %s30, %s26
      %s33 = ssub.s32 %s31, %s32
      %p34 = scmp.eq.s32.totalorder %s33, 0
      %s36 = sadd.s32 %s35, 1
      %s37 = scalar_select %p34, %s35, %s36
      %p40 = pneg %p34
      %p41 = scmp.eq.s32.totalorder %s11, 1
      %p42 = por %p40, %p41
      %p43 = scmp.ne.s32.totalorder %s35, %s38
      %p44 = scmp.eq.s32.totalorder %s11, 0
      %p45 = por %p43, %p44
      %p46 = scmp.ne.s32.totalorder %s35, %s38
      %p47 = scmp.eq.s32.totalorder %s16, 1
      %p48 = por %p46, %p47
      %p49 = scmp.ne.s32.totalorder %s38, %s39
      %p50 = scmp.eq.s32.totalorder %s16, 0
      %p51 = por %p49, %p50
      %p52 = scmp.ne.s32.totalorder %s38, %s39
      %p53 = scmp.eq.s32.totalorder %s17, 1
      %p54 = por %p52, %p53
      %p56 = scmp.ne.s32.totalorder %s39, %s55
      %p57 = scmp.eq.s32.totalorder %s17, 0
      %p58 = por %p56, %p57
      %s60 = sadd.s32 %s59, 1
      %p63 = scmp.eq.s32.totalorder %s11, 1
      %p64 = scmp.ne.s32.totalorder %s59, %s61
      %p65 = scmp.eq.s32.totalorder %s11, 0
      %p66 = por %p64, %p65
      %p67 = scmp.ne.s32.totalorder %s59, %s61
      %p68 = scmp.eq.s32.totalorder %s16, 1
      %p69 = por %p67, %p68
      %p70 = scmp.ne.s32.totalorder %s61, %s62
      %p71 = scmp.eq.s32.totalorder %s16, 0
      %p72 = por %p70, %p71
      %p73 = scmp.ne.s32.totalorder %s61, %s62
      %p74 = scmp.eq.s32.totalorder %s17, 1
      %p75 = por %p73, %p74
      %p77 = scmp.ne.s32.totalorder %s62, %s76
      %p78 = scmp.eq.s32.totalorder %s17, 0
      %p79 = por %p77, %p78
      %s80 = ssub.s32 %s18, %s30
      %p81 = scmp.eq.s32.totalorder %s80, 0
      %s83 = sadd.s32 %s82, 1
      %s84 = scalar_select %p81, %s82, %s83
      %p87 = pneg %p81
      %p88 = scmp.eq.s32.totalorder %s11, 1
      %p89 = por %p87, %p88
      %p90 = scmp.ne.s32.totalorder %s82, %s85
      %p91 = scmp.eq.s32.totalorder %s11, 0
      %p92 = por %p90, %p91
      %p93 = scmp.ne.s32.totalorder %s82, %s85
      %p94 = scmp.eq.s32.totalorder %s16, 1
      %p95 = por %p93, %p94
      %p96 = scmp.ne.s32.totalorder %s85, %s86
      %p97 = scmp.eq.s32.totalorder %s16, 0
      %p98 = por %p96, %p97
      %p99 = scmp.ne.s32.totalorder %s85, %s86
      %p100 = scmp.eq.s32.totalorder %s17, 1
      %p101 = por %p99, %p100
      %p103 = scmp.ne.s32.totalorder %s86, %s102
      %p104 = scmp.eq.s32.totalorder %s17, 0
      %p105 = por %p103, %p104
      %p106 = scmp.le.s32.totalorder 1, %s11
      %p107 = scmp.lt.s32.totalorder %s11, 3
      %p108 = pnand %p106, %p107
      %p109 = pneg %p108
      // Predicated region
      $region9: #{tpu_custom_call.1} parent=5 // pred_check
        _
      $region10: #{tpu_custom_call.1} parent=5 // pred_check_branch
        %111 = sbr.rel (%p108) target = $region12
      $region11: #{tpu_custom_call.1} parent=5 // pred_region
        %s112 = ssub.s32 %s11, 1
        // Predicated region
        $region13: #{tpu_custom_call.1} parent=11 // pred_check
          %p113 = pneg %p72
        $region14: #{tpu_custom_call.1} parent=11 // pred_check_branch
          %115 = sbr.rel (%p113) target = $region16
        $region15: #{tpu_custom_call.1} parent=11 // pred_region
          %s116 = scalar_lea.vmem %s1, 16
          // Predicated region
          $region17: #{tpu_custom_call.1} parent=15 // pred_check
            _
          $region18: #{tpu_custom_call.1} parent=15 // pred_check_branch
            %118 = sbr.rel (0) target = $region20
          $region19: #{tpu_custom_call.1} parent=15 // pred_region
            // Predicated region
            $region21: #{tpu_custom_call.1} parent=19 // pred_check
              _
            $region22: #{tpu_custom_call.1} parent=19 // pred_check_branch
              %120 = sbr.rel (0) target = $region24
            $region23: #{tpu_custom_call.1} parent=19 // pred_region
              loop: start=0, step=1, limit=1
              $region25: #{tpu_custom_call.1} parent=23 // loop_pre_header
                _
              $region26: #{tpu_custom_call.1} parent=23 // loop_header
                %s122 = sphi 0, %s126
                %p123 = scmp.ge.s32.totalorder %s122, 1
                %s127 = sphi %s116, %s116
                %s128 = sphi [#allocation2], [#allocation2]
              $region27: #{tpu_custom_call.1} parent=23 // loop_header_branch
                %125 = sbr.rel (%p123) target = $region31
              $region28: #{tpu_custom_call.1} parent=23 // loop_body
                %v129 = vld [vmem:[%s127] sm:$0xff]
                %130 = vst [vmem:[%s128] sm:$0xff] %v129
                %v131 = vld [vmem:[%s127 + $0x8] sm:$0xff]
                %132 = vst [vmem:[%s128 + $0x8] sm:$0xff] %v131
                %v133 = vld [vmem:[%s127 + $0x20] sm:$0xff]
                %134 = vst [vmem:[%s128 + $0x10] sm:$0xff] %v133
                %v135 = vld [vmem:[%s127 + $0x28] sm:$0xff]
                %136 = vst [vmem:[%s128 + $0x18] sm:$0xff] %v135
                %v137 = vld [vmem:[%s127 + $0x40] sm:$0xff]
                %138 = vst [vmem:[%s128 + $0x20] sm:$0xff] %v137
                %v139 = vld [vmem:[%s127 + $0x48] sm:$0xff]
                %140 = vst [vmem:[%s128 + $0x28] sm:$0xff] %v139
                %v141 = vld [vmem:[%s127 + $0x60] sm:$0xff]
                %142 = vst [vmem:[%s128 + $0x30] sm:$0xff] %v141
                %v143 = vld [vmem:[%s127 + $0x68] sm:$0xff]
                %144 = vst [vmem:[%s128 + $0x38] sm:$0xff] %v143
                %v145 = vld [vmem:[%s127 + $0x80] sm:$0xff]
                %146 = vst [vmem:[%s128 + $0x40] sm:$0xff] %v145
                %v147 = vld [vmem:[%s127 + $0x88] sm:$0xff]
                %148 = vst [vmem:[%s128 + $0x48] sm:$0xff] %v147
                %v149 = vld [vmem:[%s127 + $0xa0] sm:$0xff]
                %150 = vst [vmem:[%s128 + $0x50] sm:$0xff] %v149
                %v151 = vld [vmem:[%s127 + $0xa8] sm:$0xff]
                %152 = vst [vmem:[%s128 + $0x58] sm:$0xff] %v151
                %v153 = vld [vmem:[%s127 + $0xc0] sm:$0xff]
                %154 = vst [vmem:[%s128 + $0x60] sm:$0xff] %v153
                %v155 = vld [vmem:[%s127 + $0xc8] sm:$0xff]
                %156 = vst [vmem:[%s128 + $0x68] sm:$0xff] %v155
                %v157 = vld [vmem:[%s127 + $0xe0] sm:$0xff]
                %158 = vst [vmem:[%s128 + $0x70] sm:$0xff] %v157
                %v159 = vld [vmem:[%s127 + $0xe8] sm:$0xff]
                %160 = vst [vmem:[%s128 + $0x78] sm:$0xff] %v159
                %v161 = vld [vmem:[%s127 + $0x100] sm:$0xff]
                %162 = vst [vmem:[%s128 + $0x80] sm:$0xff] %v161
                %v163 = vld [vmem:[%s127 + $0x108] sm:$0xff]
                %164 = vst [vmem:[%s128 + $0x88] sm:$0xff] %v163
                %v165 = vld [vmem:[%s127 + $0x120] sm:$0xff]
                %166 = vst [vmem:[%s128 + $0x90] sm:$0xff] %v165
                %v167 = vld [vmem:[%s127 + $0x128] sm:$0xff]
                %168 = vst [vmem:[%s128 + $0x98] sm:$0xff] %v167
                %v169 = vld [vmem:[%s127 + $0x140] sm:$0xff]
                %170 = vst [vmem:[%s128 + $0xa0] sm:$0xff] %v169
                %v171 = vld [vmem:[%s127 + $0x148] sm:$0xff]
                %172 = vst [vmem:[%s128 + $0xa8] sm:$0xff] %v171
                %v173 = vld [vmem:[%s127 + $0x160] sm:$0xff]
                %174 = vst [vmem:[%s128 + $0xb0] sm:$0xff] %v173
                %v175 = vld [vmem:[%s127 + $0x168] sm:$0xff]
                %176 = vst [vmem:[%s128 + $0xb8] sm:$0xff] %v175
              $region29: #{tpu_custom_call.1} parent=23 // loop_footer
                %s126 = sadd.s32 1, %s122
              $region30: #{tpu_custom_call.1} parent=23 // loop_footer_branch
                %121 = sbr.rel target = $region26
              $region31: #{tpu_custom_call.1} parent=23 // loop_exit
                _
            $region24: #{tpu_custom_call.1} parent=19 // pred_fallthru
              _
            // Predicated region
            $region32: #{tpu_custom_call.1} parent=19 // pred_check
              _
            $region33: #{tpu_custom_call.1} parent=19 // pred_check_branch
              %178 = sbr.rel target = $region35
            $region34: #{tpu_custom_call.1} parent=19 // pred_region
              _
            $region35: #{tpu_custom_call.1} parent=19 // pred_fallthru
              _
          $region20: #{tpu_custom_call.1} parent=15 // pred_fallthru
            _
          %179 = vnop
        $region16: #{tpu_custom_call.1} parent=11 // pred_fallthru
          _
      $region12: #{tpu_custom_call.1} parent=5 // pred_fallthru
        _
      %p180 = scmp.lt.s32.totalorder %s11, 2
      // Predicated region
      $region36: #{tpu_custom_call.1} parent=5 // pred_check
        %p181 = pneg %p180
      $region37: #{tpu_custom_call.1} parent=5 // pred_check_branch
        %183 = sbr.rel (%p181) target = $region39
      $region38: #{tpu_custom_call.1} parent=5 // pred_region
        // Predicated region
        $region40: #{tpu_custom_call.1} parent=38 // pred_check
          %p184 = pneg %p45
        $region41: #{tpu_custom_call.1} parent=38 // pred_check_branch
          %186 = sbr.rel (%p184) target = $region43
        $region42: #{tpu_custom_call.1} parent=38 // pred_region
          %s187 = sadd.s32 %s18, %s19
          %s188 = smul.u32 16, %s187
          %p189 = scmp.lt.s32.totalorder %s188, 31
          %s190 = scalar_select %p189, %s188, 31
          %s191 = smul.addr %s190, 8
          %s192 = scalar_lea.vmem %s0, %s191
          %s193 = sadd.s32 %s18, %s19
          %s194 = smul.u32 16, %s193
        $region43: #{tpu_custom_call.1} parent=38 // pred_fallthru
          _
      $region39: #{tpu_custom_call.1} parent=5 // pred_fallthru
        _
      %p195 = scmp.le.s32.totalorder 1, %s11
      %p196 = scmp.lt.s32.totalorder %s11, 3
      %p197 = pnand %p195, %p196
      %p198 = pneg %p197
      // Predicated region
      $region44: #{tpu_custom_call.1} parent=5 // pred_check
        _
      $region45: #{tpu_custom_call.1} parent=5 // pred_check_branch
        %200 = sbr.rel (%p197) target = $region47
      $region46: #{tpu_custom_call.1} parent=5 // pred_region
        %s201 = ssub.s32 %s11, 1
        // Predicated region
        $region48: #{tpu_custom_call.1} parent=46 // pred_check
          %p202 = pneg %p72
        $region49: #{tpu_custom_call.1} parent=46 // pred_check_branch
          %204 = sbr.rel (%p202) target = $region51
        $region50: #{tpu_custom_call.1} parent=46 // pred_region
          _
        $region51: #{tpu_custom_call.1} parent=46 // pred_fallthru
          _
        %s205 = sadd.s32 %s20, %s21
        %s206 = smul.u32 16, %s205
        %p207 = scmp.lt.s32.totalorder %s206, 31
        %s208 = scalar_select %p207, %s206, 31
        %s209 = smul.addr %s208, 8
        %s210 = scalar_lea.vmem %s0, %s209
        %p211 = pneg %p51
        %p212 = pneg %p48
        %p213 = pneg %p72
        %p214 = pneg %p69
        %p215 = pneg %p98
        %p216 = pneg %p95
        %s217 = sand.u32 %s85, 1
        %s218 = scalar_lea.sflag [#allocation4], %s217
        %s219 = sand.u32 %s85, 1
        %s220 = smul.addr %s219, 4
        %s221 = scalar_lea.vmem [#allocation3], %s220
        %s222 = sadd.s32 %s20, %s21
        %s223 = smul.u32 16, %s222
        %p224 = scmp.lt.s32.totalorder %s223, 31
        %s225 = scalar_select %p224, %s223, 31
        %s226 = smul.addr %s225, 8
        %s227 = scalar_lea.vmem %s0, %s226
        %s228 = sadd.s32 %s20, %s21
        %s229 = smul.u32 16, %s228
        %s230 = smul.u32 2, %s20
        %p231 = scmp.eq.s32.totalorder %s21, 0
        // Predicated region
        $region52: #{tpu_custom_call.1} parent=46 // pred_check
          %p232 = pneg %p231
        $region53: #{tpu_custom_call.1} parent=46 // pred_check_branch
          %234 = sbr.rel (%p232) target = $region55
        $region54: #{tpu_custom_call.1} parent=46 // pred_region
          %235 = vst [vmem:[%s221] sm:$0xf] 0.0
        $region55: #{tpu_custom_call.1} parent=46 // pred_fallthru
          _
        %v236 = vld [vmem:[%s227] sm:$0xff]
        %v237 = vld [vmem:[%s227 + $0x8] sm:$0xff]
        %v238 = vld [vmem:[%s227 + $0x10] sm:$0xff]
        %v239 = vld [vmem:[%s227 + $0x18] sm:$0xff]
        %v240 = vld [vmem:[%s227 + $0x20] sm:$0xff]
        %v241 = vld [vmem:[%s227 + $0x28] sm:$0xff]
        %v242 = vld [vmem:[%s227 + $0x30] sm:$0xff]
        %v243 = vld [vmem:[%s227 + $0x38] sm:$0xff]
        %v244 = vld [vmem:[%s227 + $0x40] sm:$0xff]
        %v245 = vld [vmem:[%s227 + $0x48] sm:$0xff]
        %v246 = vld [vmem:[%s227 + $0x50] sm:$0xff]
        %v247 = vld [vmem:[%s227 + $0x58] sm:$0xff]
        %v248 = vld [vmem:[%s227 + $0x60] sm:$0xff]
        %v249 = vld [vmem:[%s227 + $0x68] sm:$0xff]
        %v250 = vld [vmem:[%s227 + $0x70] sm:$0xff]
        %v251 = vld [vmem:[%s227 + $0x78] sm:$0xff]
        %v252 = vld [vmem:[#allocation2] sm:$0xff]
        %v253 = vld [vmem:[#allocation2 + $0x8] sm:$0xff]
        %v254 = vld [vmem:[#allocation2 + $0x10] sm:$0xff]
        %v255 = vld [vmem:[#allocation2 + $0x18] sm:$0xff]
        %v256 = vld [vmem:[#allocation2 + $0x20] sm:$0xff]
        %v257 = vld [vmem:[#allocation2 + $0x28] sm:$0xff]
        %v258 = vld [vmem:[#allocation2 + $0x30] sm:$0xff]
        %v259 = vld [vmem:[#allocation2 + $0x38] sm:$0xff]
        %v260 = vld [vmem:[#allocation2 + $0x40] sm:$0xff]
        %v261 = vld [vmem:[#allocation2 + $0x48] sm:$0xff]
        %v262 = vld [vmem:[#allocation2 + $0x50] sm:$0xff]
        %v263 = vld [vmem:[#allocation2 + $0x58] sm:$0xff]
        %v264 = vld [vmem:[#allocation2 + $0x60] sm:$0xff]
        %v265 = vld [vmem:[#allocation2 + $0x68] sm:$0xff]
        %v266 = vld [vmem:[#allocation2 + $0x70] sm:$0xff]
        %v267 = vld [vmem:[#allocation2 + $0x78] sm:$0xff]
        %v268 = vld [vmem:[#allocation2 + $0x80] sm:$0xff]
        %v269 = vld [vmem:[#allocation2 + $0x88] sm:$0xff]
        %v270 = vld [vmem:[#allocation2 + $0x90] sm:$0xff]
        %v271 = vld [vmem:[#allocation2 + $0x98] sm:$0xff]
        %v272 = vld [vmem:[#allocation2 + $0xa0] sm:$0xff]
        %v273 = vld [vmem:[#allocation2 + $0xa8] sm:$0xff]
        %v274 = vld [vmem:[#allocation2 + $0xb0] sm:$0xff]
        %v275 = vld [vmem:[#allocation2 + $0xb8] sm:$0xff]
        %vm276 = vcmask 785408
        %v278 = vsel %vm276, %v236, 0
        %v281 = vsel %vm276, %v237, 0
        %v284 = vsel %vm276, %v238, 0
        %v287 = vsel %vm276, %v239, 0
        %v290 = vsel %vm276, %v240, 0
        %v293 = vsel %vm276, %v241, 0
        %v296 = vsel %vm276, %v242, 0
        %v299 = vsel %vm276, %v243, 0
        %v302 = vsel %vm276, %v244, 0
        %v305 = vsel %vm276, %v245, 0
        %v308 = vsel %vm276, %v246, 0
        %v311 = vsel %vm276, %v247, 0
        %v314 = vsel %vm276, %v248, 0
        %v317 = vsel %vm276, %v249, 0
        %v320 = vsel %vm276, %v250, 0
        %v323 = vsel %vm276, %v251, 0
        %325 = vmatpush.msra.mxu0 0.0
        %326 = vmatpush.msra.mxu0 0.0
        %327 = vmatpush.msra.mxu0 0.0
        %328 = vmatpush.msra.mxu0 0.0
        %329 = vmatpush.msra.mxu0 %v274
        %330 = vmatpush.msra.mxu0 %v272
        %331 = vmatpush.msra.mxu0 %v270
        %332 = vmatpush.msra.mxu0 %v268
        %333 = vmatpush.msra.mxu0 %v266
        %334 = vmatpush.msra.mxu0 %v264
        %335 = vmatpush.msra.mxu0 %v262
        %336 = vmatpush.msra.mxu0 %v260
        %337 = vmatpush.msra.mxu0 %v258
        %338 = vmatpush.msra.mxu0 %v256
        %339 = vmatpush.msra.mxu0 %v254
        %340 = vmatpush.msra.mxu0 %v252
        %341 = vmatmul.f32.gmra.mxu0 %v278
        %v342 = vpop.f32.mrf.mxu0
        %v343 = vadd.f32 0.0, %v342
        %344 = vmatmul.f32.gmra.mxu0 %v281
        %v345 = vpop.f32.mrf.mxu0
        %v346 = vadd.f32 0.0, %v345
        %347 = vmatmul.f32.gmra.mxu0 %v284
        %v348 = vpop.f32.mrf.mxu0
        %v349 = vadd.f32 0.0, %v348
        %350 = vmatmul.f32.gmra.mxu0 %v287
        %v351 = vpop.f32.mrf.mxu0
        %v352 = vadd.f32 0.0, %v351
        %353 = vmatmul.f32.gmra.mxu0 %v290
        %v354 = vpop.f32.mrf.mxu0
        %v355 = vadd.f32 0.0, %v354
        %356 = vmatmul.f32.gmra.mxu0 %v293
        %v357 = vpop.f32.mrf.mxu0
        %v358 = vadd.f32 0.0, %v357
        %359 = vmatmul.f32.gmra.mxu0 %v296
        %v360 = vpop.f32.mrf.mxu0
        %v361 = vadd.f32 0.0, %v360
        %362 = vmatmul.f32.gmra.mxu0 %v299
        %v363 = vpop.f32.mrf.mxu0
        %v364 = vadd.f32 0.0, %v363
        %365 = vmatmul.f32.gmra.mxu0 %v302
        %v366 = vpop.f32.mrf.mxu0
        %v367 = vadd.f32 0.0, %v366
        %368 = vmatmul.f32.gmra.mxu0 %v305
        %v369 = vpop.f32.mrf.mxu0
        %v370 = vadd.f32 0.0, %v369
        %371 = vmatmul.f32.gmra.mxu0 %v308
        %v372 = vpop.f32.mrf.mxu0
        %v373 = vadd.f32 0.0, %v372
        %374 = vmatmul.f32.gmra.mxu0 %v311
        %v375 = vpop.f32.mrf.mxu0
        %v376 = vadd.f32 0.0, %v375
        %377 = vmatmul.f32.gmra.mxu0 %v314
        %v378 = vpop.f32.mrf.mxu0
        %v379 = vadd.f32 0.0, %v378
        %380 = vmatmul.f32.gmra.mxu0 %v317
        %v381 = vpop.f32.mrf.mxu0
        %v382 = vadd.f32 0.0, %v381
        %383 = vmatmul.f32.gmra.mxu0 %v320
        %v384 = vpop.f32.mrf.mxu0
        %v385 = vadd.f32 0.0, %v384
        %386 = vmatmul.f32.gmra.mxu0 %v323
        %v387 = vpop.f32.mrf.mxu0
        %v388 = vadd.f32 0.0, %v387
        %389 = vdwg.mxu0
        %390 = vmatpush.msra.mxu0 0.0
        %391 = vmatpush.msra.mxu0 0.0
        %392 = vmatpush.msra.mxu0 0.0
        %393 = vmatpush.msra.mxu0 0.0
        %394 = vmatpush.msra.mxu0 %v275
        %395 = vmatpush.msra.mxu0 %v273
        %396 = vmatpush.msra.mxu0 %v271
        %397 = vmatpush.msra.mxu0 %v269
        %398 = vmatpush.msra.mxu0 %v267
        %399 = vmatpush.msra.mxu0 %v265
        %400 = vmatpush.msra.mxu0 %v263
        %401 = vmatpush.msra.mxu0 %v261
        %402 = vmatpush.msra.mxu0 %v259
        %403 = vmatpush.msra.mxu0 %v257
        %404 = vmatpush.msra.mxu0 %v255
        %405 = vmatpush.msra.mxu0 %v253
        %406 = vmatmul.f32.gmra.mxu0 %v278
        %v407 = vpop.f32.mrf.mxu0
        %v408 = vadd.f32 0.0, %v407
        %409 = vmatmul.f32.gmra.mxu0 %v281
        %v410 = vpop.f32.mrf.mxu0
        %v411 = vadd.f32 0.0, %v410
        %412 = vmatmul.f32.gmra.mxu0 %v284
        %v413 = vpop.f32.mrf.mxu0
        %v414 = vadd.f32 0.0, %v413
        %415 = vmatmul.f32.gmra.mxu0 %v287
        %v416 = vpop.f32.mrf.mxu0
        %v417 = vadd.f32 0.0, %v416
        %418 = vmatmul.f32.gmra.mxu0 %v290
        %v419 = vpop.f32.mrf.mxu0
        %v420 = vadd.f32 0.0, %v419
        %421 = vmatmul.f32.gmra.mxu0 %v293
        %v422 = vpop.f32.mrf.mxu0
        %v423 = vadd.f32 0.0, %v422
        %424 = vmatmul.f32.gmra.mxu0 %v296
        %v425 = vpop.f32.mrf.mxu0
        %v426 = vadd.f32 0.0, %v425
        %427 = vmatmul.f32.gmra.mxu0 %v299
        %v428 = vpop.f32.mrf.mxu0
        %v429 = vadd.f32 0.0, %v428
        %430 = vmatmul.f32.gmra.mxu0 %v302
        %v431 = vpop.f32.mrf.mxu0
        %v432 = vadd.f32 0.0, %v431
        %433 = vmatmul.f32.gmra.mxu0 %v305
        %v434 = vpop.f32.mrf.mxu0
        %v435 = vadd.f32 0.0, %v434
        %436 = vmatmul.f32.gmra.mxu0 %v308
        %v437 = vpop.f32.mrf.mxu0
        %v438 = vadd.f32 0.0, %v437
        %439 = vmatmul.f32.gmra.mxu0 %v311
        %v440 = vpop.f32.mrf.mxu0
        %v441 = vadd.f32 0.0, %v440
        %442 = vmatmul.f32.gmra.mxu0 %v314
        %v443 = vpop.f32.mrf.mxu0
        %v444 = vadd.f32 0.0, %v443
        %445 = vmatmul.f32.gmra.mxu0 %v317
        %v446 = vpop.f32.mrf.mxu0
        %v447 = vadd.f32 0.0, %v446
        %448 = vmatmul.f32.gmra.mxu0 %v320
        %v449 = vpop.f32.mrf.mxu0
        %v450 = vadd.f32 0.0, %v449
        %451 = vmatmul.f32.gmra.mxu0 %v323
        %v452 = vpop.f32.mrf.mxu0
        %v453 = vadd.f32 0.0, %v452
        %454 = vdwg.mxu0
        %v455 = vld [vmem:[%s221] sm:$0xf]
        %v456 = vadd.f32 %v343, %v346
        %v457 = vadd.f32 %v456, %v349
        %v458 = vadd.f32 %v457, %v352
        %v459 = vadd.f32 %v458, %v355
        %v460 = vadd.f32 %v459, %v358
        %v461 = vadd.f32 %v460, %v361
        %v462 = vadd.f32 %v461, %v364
        %v463 = vadd.f32 %v462, %v367
        %v464 = vadd.f32 %v463, %v370
        %v465 = vadd.f32 %v464, %v373
        %v466 = vadd.f32 %v465, %v376
        %v467 = vadd.f32 %v466, %v379
        %v468 = vadd.f32 %v467, %v382
        %v469 = vadd.f32 %v468, %v385
        %v470 = vadd.f32 %v469, %v388
        %v471 = vrot.slane %v470, 4
        %v472 = vadd.f32 %v470, %v471
        %v473 = vrot.slane %v472, 2
        %v474 = vadd.f32 %v472, %v473
        %v475 = vrot.slane %v474, 1
        %v476 = vadd.f32 %v474, %v475
        %v477 = vadd.f32 %v408, %v411
        %v478 = vadd.f32 %v477, %v414
        %v479 = vadd.f32 %v478, %v417
        %v480 = vadd.f32 %v479, %v420
        %v481 = vadd.f32 %v480, %v423
        %v482 = vadd.f32 %v481, %v426
        %v483 = vadd.f32 %v482, %v429
        %v484 = vadd.f32 %v483, %v432
        %v485 = vadd.f32 %v484, %v435
        %v486 = vadd.f32 %v485, %v438
        %v487 = vadd.f32 %v486, %v441
        %v488 = vadd.f32 %v487, %v444
        %v489 = vadd.f32 %v488, %v447
        %v490 = vadd.f32 %v489, %v450
        %v491 = vadd.f32 %v490, %v453
        %v492 = vrot.slane %v491, 4
        %v493 = vadd.f32 %v491, %v492
        %v494 = vrot.slane %v493, 2
        %v495 = vadd.f32 %v493, %v494
        %v496 = vrot.slane %v495, 1
        %v497 = vadd.f32 %v495, %v496
        %v498 = vmul.f32 %v343, %v343
        %v499 = vmul.f32 %v408, %v408
        %v500 = vmul.f32 %v346, %v346
        %v501 = vmul.f32 %v411, %v411
        %v502 = vmul.f32 %v349, %v349
        %v503 = vmul.f32 %v414, %v414
        %v504 = vmul.f32 %v352, %v352
        %v505 = vmul.f32 %v417, %v417
        %v506 = vmul.f32 %v355, %v355
        %v507 = vmul.f32 %v420, %v420
        %v508 = vmul.f32 %v358, %v358
        %v509 = vmul.f32 %v423, %v423
        %v510 = vmul.f32 %v361, %v361
        %v511 = vmul.f32 %v426, %v426
        %v512 = vmul.f32 %v364, %v364
        %v513 = vmul.f32 %v429, %v429
        %v514 = vmul.f32 %v367, %v367
        %v515 = vmul.f32 %v432, %v432
        %v516 = vmul.f32 %v370, %v370
        %v517 = vmul.f32 %v435, %v435
        %v518 = vmul.f32 %v373, %v373
        %v519 = vmul.f32 %v438, %v438
        %v520 = vmul.f32 %v376, %v376
        %v521 = vmul.f32 %v441, %v441
        %v522 = vmul.f32 %v379, %v379
        %v523 = vmul.f32 %v444, %v444
        %v524 = vmul.f32 %v382, %v382
        %v525 = vmul.f32 %v447, %v447
        %v526 = vmul.f32 %v385, %v385
        %v527 = vmul.f32 %v450, %v450
        %v528 = vmul.f32 %v388, %v388
        %v529 = vmul.f32 %v453, %v453
        %v530 = vadd.f32 %v498, %v500
        %v531 = vadd.f32 %v530, %v502
        %v532 = vadd.f32 %v531, %v504
        %v533 = vadd.f32 %v532, %v506
        %v534 = vadd.f32 %v533, %v508
        %v535 = vadd.f32 %v534, %v510
        %v536 = vadd.f32 %v535, %v512
        %v537 = vadd.f32 %v536, %v514
        %v538 = vadd.f32 %v537, %v516
        %v539 = vadd.f32 %v538, %v518
        %v540 = vadd.f32 %v539, %v520
        %v541 = vadd.f32 %v540, %v522
        %v542 = vadd.f32 %v541, %v524
        %v543 = vadd.f32 %v542, %v526
        %v544 = vadd.f32 %v543, %v528
        %v545 = vrot.slane %v544, 4
        %v546 = vadd.f32 %v544, %v545
        %v547 = vrot.slane %v546, 2
        %v548 = vadd.f32 %v546, %v547
        %v549 = vrot.slane %v548, 1
        %v550 = vadd.f32 %v548, %v549
        %v551 = vadd.f32 %v499, %v501
        %v552 = vadd.f32 %v551, %v503
        %v553 = vadd.f32 %v552, %v505
        %v554 = vadd.f32 %v553, %v507
        %v555 = vadd.f32 %v554, %v509
        %v556 = vadd.f32 %v555, %v511
        %v557 = vadd.f32 %v556, %v513
        %v558 = vadd.f32 %v557, %v515
        %v559 = vadd.f32 %v558, %v517
        %v560 = vadd.f32 %v559, %v519
        %v561 = vadd.f32 %v560, %v521
        %v562 = vadd.f32 %v561, %v523
        %v563 = vadd.f32 %v562, %v525
        %v564 = vadd.f32 %v563, %v527
        %v565 = vadd.f32 %v564, %v529
        %v566 = vrot.slane %v565, 4
        %v567 = vadd.f32 %v565, %v566
        %v568 = vrot.slane %v567, 2
        %v569 = vadd.f32 %v567, %v568
        %v570 = vrot.slane %v569, 1
        %v571 = vadd.f32 %v569, %v570
        %vm572 = vcmask 1040384
        %v573 = vsel %vm572, %v476, %v550
        %v574 = vsel %vm572, %v497, %v571
        %v577 = vrot.slane %v574, 6
        %vm578 = vcmask 1041408
        %v579 = vsel %vm578, %v573, %v577
        %v581 = vadd.f32 %v455, %v579
        %582 = vst [vmem:[%s221] sm:$0xf] %v581
        %s583 = sand.u32 %s85, 1
        %s584 = scalar_lea.sflag [#allocation4], %s583
        %s585 = sand.u32 %s85, 1
        %s586 = smul.addr %s585, 4
        %s587 = scalar_lea.vmem [#allocation3], %s586
        // Predicated region
        $region56: #{tpu_custom_call.1} parent=46 // pred_check
          %p588 = pneg %p95
        $region57: #{tpu_custom_call.1} parent=46 // pred_check_branch
          %590 = sbr.rel (%p588) target = $region59
        $region58: #{tpu_custom_call.1} parent=46 // pred_region
          %s591 = smul.u32 2, %s20
          %593 = vsyncadd %s584, 0
          %s594 = smul.addr %s591, 2
          %s595 = scalar_lea.hbm %s2, %s594
          %s597 = sshll.u32 %s587, 4
          %s598 = int_to_ptr.vmem [resolvable:$true] %s597
          %s599 = sshll.u32 %s595, 4
          %s600 = int_to_ptr.hbm [resolvable:$true] %s599
          %602 = dma.vmem_to_hbm [thread:$0]  %s598, 64, %s600, %s584
        $region59: #{tpu_custom_call.1} parent=46 // pred_fallthru
          _
      $region47: #{tpu_custom_call.1} parent=5 // pred_fallthru
        _
      %p603 = scmp.le.s32.totalorder 2, %s11
      // Predicated region
      $region60: #{tpu_custom_call.1} parent=5 // pred_check
        %p604 = pneg %p603
      $region61: #{tpu_custom_call.1} parent=5 // pred_check_branch
        %606 = sbr.rel (%p604) target = $region63
      $region62: #{tpu_custom_call.1} parent=5 // pred_region
        %s607 = ssub.s32 %s11, 2
        // Predicated region
        $region64: #{tpu_custom_call.1} parent=62 // pred_check
          %p608 = pneg %p101
        $region65: #{tpu_custom_call.1} parent=62 // pred_check_branch
          %610 = sbr.rel (%p608) target = $region67
        $region66: #{tpu_custom_call.1} parent=62 // pred_region
          %s611 = sand.u32 %s86, 1
          %s612 = scalar_lea.sflag [#allocation4], %s611
          %s613 = sand.u32 %s86, 1
          %s614 = smul.addr %s613, 4
          %s615 = scalar_lea.vmem [#allocation3], %s614
          %617 = dma.done %s612, 64
        $region67: #{tpu_custom_call.1} parent=62 // pred_fallthru
          _
      $region63: #{tpu_custom_call.1} parent=5 // pred_fallthru
        _
    $region6: #{tpu_custom_call.1} parent=1 // loop_footer
      %s15 = sadd.s32 1, %s11
    $region7: #{tpu_custom_call.1} parent=1 // loop_footer_branch
      %10 = sbr.rel target = $region3
    $region8: #{tpu_custom_call.1} parent=1 // loop_exit
      _
    %618 = vsyncpa [#allocation4], 1
    %s619 = scalar_lea.sflag [#allocation4], 1
    %620 = vsyncpa %s619, 1

</llo_original>
